<compile_context>
chip_gen: v5e
topology: v5e:2x2
jax: 0.10.0
libtpu: 0.0.40
codegen_flags: <defaults>
</compile_context>

<pallas_src>
import functools

import jax
import jax.numpy as jnp
from jax.experimental import pallas as pl
from jax.experimental.pallas import tpu as pltpu


# Candidate lane widths (largest first); all multiples of 128.
_LANE_CANDIDATES = (8192, 4096, 2048, 1024, 512, 256, 128)
# ~2 MiB per tile buffer => <= ~8 MiB of double-buffered pipeline buffers,
# comfortably under the default scoped VMEM limit on v5e/v6e/v7x.
_TARGET_BLOCK_BYTES = 2 * 1024 * 1024


def _scale_clip_kernel(x_ref, o_ref, *, scale, clip_min, clip_max):
    # `scale` / clip bounds are Python floats -> weak-typed immediate splats,
    # no per-tile broadcast; pure VPU stream-through.
    v = x_ref[...] * scale
    if clip_min is not None:
        v = jnp.clip(v, clip_min, clip_max)
    o_ref[...] = v


@functools.partial(jax.jit, static_argnames=("scale", "clip_min", "clip_max"))
def _scale_clip(x, *, scale, clip_min, clip_max):
    """Elementwise scale (+ optional clamp) on an arbitrary-shape array.

    Layout-invariant: flattens to a lane-dense [rows, C] view (C a multiple
    of 128), tiles rows over a 1D parallel grid, then restores the shape.
    """
    orig_shape = x.shape
    n = x.size
    flat = x.reshape(-1)

    # Pad flat length to a multiple of 128 lanes (no-op for typical shapes).
    pad = (-n) % 128
    if pad:
        flat = jnp.pad(flat, (0, pad))
    npad = n + pad

    # Largest lane width that divides the padded element count.
    cols = 128
    for c in _LANE_CANDIDATES:
        if npad % c == 0:
            cols = c
            break
    rows = npad // cols
    x2d = flat.reshape(rows, cols)

    # Row tile: multiple of 8, sized so one tile is ~2 MiB (or the full array
    # if it is smaller than that).
    bytes_per_row = cols * x2d.dtype.itemsize
    tr = (_TARGET_BLOCK_BYTES // bytes_per_row) // 8 * 8
    tr = max(8, tr)
    if tr >= rows:
        tr = rows  # full-extent block dim always satisfies tiling constraints

    grid = (pl.cdiv(rows, tr),)
    kernel = functools.partial(
        _scale_clip_kernel, scale=scale, clip_min=clip_min, clip_max=clip_max
    )

    # NOTE: input_output_aliases is deliberately NOT used: under jit the
    # aliased operand is typically a (non-donated) entry-parameter bitcast,
    # and XLA would insert an extra HBM copy to honor the alias.
    out2d = pl.pallas_call(
        kernel,
        out_shape=jax.ShapeDtypeStruct((rows, cols), x2d.dtype),
        grid=grid,
        in_specs=[pl.BlockSpec((tr, cols), lambda i: (i, 0))],
        out_specs=pl.BlockSpec((tr, cols), lambda i: (i, 0)),
        compiler_params=pltpu.CompilerParams(
            dimension_semantics=("parallel",)
        ),
    )(x2d)

    out = out2d.reshape(-1)
    if pad:
        out = out[:n]
    return out.reshape(orig_shape)


class AttentionScaler:
    """JAX/Pallas port of the PyTorch AttentionScaler (forward pass only)."""

    def __init__(self, scale_factor=1.0, clip_range=None, verbose=False, num_heads=None):
        if not isinstance(scale_factor, (int, float)) or scale_factor <= 0:
            raise ValueError(f"'scale_factor' must be positive. Got: {scale_factor}")
        self.scale_factor = float(scale_factor)
        if clip_range is not None:
            if not isinstance(clip_range, tuple) or len(clip_range) != 2:
                raise ValueError(f"'clip_range' must be a (min, max) tuple. Got: {clip_range}")
            mn, mx = clip_range
            if not (isinstance(mn, (int, float)) and isinstance(mx, (int, float))):
                raise ValueError(f"'clip_range' values must be numeric. Got: {clip_range}")
            if mn >= mx:
                raise ValueError(f"clip_range min ({mn}) must be < max ({mx})")
        self.clip_range = clip_range
        if not isinstance(verbose, bool):
            raise TypeError(f"'verbose' must be a boolean. Got: {verbose}")
        self.verbose = verbose
        if num_heads is not None and (not isinstance(num_heads, int) or num_heads <= 0):
            raise ValueError(f"'num_heads' must be a positive int. Got: {num_heads}")
        self.num_heads = num_heads

    def __call__(self, attention_scores):
        x = attention_scores
        ndim = x.ndim
        if ndim not in (2, 3, 4):
            raise ValueError(f"Expected 2D, 3D or 4D input, got {ndim}D")

        # Validation mirroring the PyTorch module's head-splitting checks.
        # (The actual 3D->4D->3D permute round-trip cancels for this
        #  elementwise op, so no data movement is performed for it.)
        if ndim in (2, 3):
            if self.num_heads is None:
                raise ValueError("For 3D input, 'num_heads' must be specified.")
            embed_dim = x.shape[-1]
            if embed_dim % self.num_heads != 0:
                raise ValueError(
                    f"embed_dim ({embed_dim}) must be divisible by num_heads ({self.num_heads})"
                )
        elif ndim == 4:
            if self.num_heads is not None and x.shape[1] != self.num_heads:
                raise ValueError(
                    f"Tensor num_heads ({x.shape[1]}) does not match expected ({self.num_heads})"
                )
            if any(d <= 0 for d in x.shape):
                raise ValueError(f"All dimensions must be > 0. Got: {x.shape}")

        clip_min, clip_max = (
            self.clip_range if self.clip_range is not None else (None, None)
        )
        # TODO(synk): re_normalize branch is unreachable in the PyTorch module
        # (attribute never set in __init__), so it is intentionally omitted.
        return _scale_clip(
            x,
            scale=self.scale_factor,
            clip_min=None if clip_min is None else float(clip_min),
            clip_max=None if clip_max is None else float(clip_max),
        )


if __name__ == "__main__":
    key = jax.random.PRNGKey(0)
    k1, k2, k3 = jax.random.split(key, 3)

    # 3D attention output: [batch=2, seq=8, embed=32], num_heads=4
    x3d = jax.random.normal(k1, (2, 8, 32), dtype=jnp.float32)
    scaler = AttentionScaler(scale_factor=0.5, clip_range=(-0.25, 0.25), num_heads=4)
    out3 = jax.block_until_ready(scaler(x3d))
    ref3 = jnp.clip(x3d * 0.5, -0.25, 0.25)
    assert out3.shape == x3d.shape and out3.dtype == x3d.dtype
    assert jnp.allclose(out3, ref3, atol=1e-6), "3D mismatch vs reference"

    # 4D path: [batch=2, heads=4, seq=8, head_dim=8]
    x4d = jax.random.normal(k2, (2, 4, 8, 8), dtype=jnp.float32)
    scaler4 = AttentionScaler(scale_factor=2.0, clip_range=None, num_heads=4)
    out4 = jax.block_until_ready(scaler4(x4d))
    assert jnp.allclose(out4, x4d * 2.0, atol=1e-6), "4D mismatch vs reference"

    # 2D path: [seq=8, embed=32]
    x2 = jax.random.normal(k3, (8, 32), dtype=jnp.float32)
    out2 = jax.block_until_ready(scaler(x2))
    assert jnp.allclose(out2, jnp.clip(x2 * 0.5, -0.25, 0.25), atol=1e-6), "2D mismatch"

    # Element count not divisible by 128 exercises the pad/lane-dense fallback.
    x_odd = jax.random.normal(k1, (2, 4, 5, 6), dtype=jnp.float32)
    out_odd = jax.block_until_ready(scaler4(x_odd))
    assert jnp.allclose(out_odd, x_odd * 2.0, atol=1e-6), "ragged-size mismatch"

    print("KERNEL_OK")
</pallas_src>

<mosaic_0001>
module attributes {stable_mosaic.version = 11 : i64} {
  func.func @_scale_clip_kernel(%arg0: i32, %arg1: memref<1x512xf32, #tpu.memory_space<vmem>>, %arg2: memref<1x512xf32, #tpu.memory_space<vmem>>) attributes {dimension_semantics = [#tpu.dimension_semantics<parallel>], iteration_bounds = array<i64: 1>, scalar_prefetch = 0 : i64, scratch_operands = 0 : i64, tpu.core_type = #tpu.core_type<tc>, window_params = [{transform_indices = @transform_0, window_bounds = array<i64: 1, 512>}, {transform_indices = @transform_1, window_bounds = array<i64: 1, 512>}]} {
    %c0 = arith.constant 0 : index
    %c0_0 = arith.constant 0 : index
    %0 = vector.load %arg1[%c0, %c0_0] : memref<1x512xf32, #tpu.memory_space<vmem>>, vector<1x512xf32>
    %cst = arith.constant 5.000000e-01 : f32
    %1 = vector.broadcast %cst : f32 to vector<1x512xf32>
    %2 = arith.mulf %0, %1 : vector<1x512xf32>
    %cst_1 = arith.constant -2.500000e-01 : f32
    %cst_2 = arith.constant 2.500000e-01 : f32
    %3 = vector.broadcast %cst_1 : f32 to vector<1x512xf32>
    %4 = arith.maximumf %3, %2 : vector<1x512xf32>
    %5 = vector.broadcast %cst_2 : f32 to vector<1x512xf32>
    %6 = arith.minimumf %5, %4 : vector<1x512xf32>
    %c0_3 = arith.constant 0 : index
    %c0_4 = arith.constant 0 : index
    %7 = vector.load %arg2[%c0_3, %c0_4] : memref<1x512xf32, #tpu.memory_space<vmem>>, vector<1x512xf32>
    tpu.vector_store %arg2[%c0_3, %c0_4], %6 {strides = array<i32>} : memref<1x512xf32, #tpu.memory_space<vmem>>, vector<1x512xf32>,
    return
  }
  func.func @transform_0(%arg0: i32) -> (i32, i32) {
    %c0_i32 = arith.constant 0 : i32
    %c0_i32_0 = arith.constant 0 : i32
    return %arg0, %c0_i32 : i32, i32
  }
  func.func @transform_1(%arg0: i32) -> (i32, i32) {
    %c0_i32 = arith.constant 0 : i32
    %c0_i32_0 = arith.constant 0 : i32
    return %arg0, %c0_i32 : i32, i32
  }
}

</mosaic_0001>

<llo_original>
// kernel: _scale_clip.1
$region0: #{_scale_clip.1}
  #allocation0 [shape = 'u32[]', space=smem, size = 0x4, offset = 0x4, fixed_abs, tag = 'smem constant byte address 0x4 - core index']
  #allocation1 [shape = 'u32[72,128]{1,0:T(1,128)}', space=vmem, size = 0x9000, scoped, tag = 'internal scratch']
  %s0 = inlined_call_operand.vmem [shape: f32[1,512], index: 0, kind: input, shape index: {}]
  %s1 = inlined_call_operand.vmem [shape: f32[1,512], index: 1, kind: output, shape index: {}]
  %s2 = sld [smem:[#allocation0]]
  $region14: #{_scale_clip.1} parent=0
    _
  %s4 = ssub.s32 1, %s2
  %s5 = scalar_select 0, %s4, %s2
  // Predicated region
  $region2: #{_scale_clip.1} parent=0 // pred_check
    _
  $region3: #{_scale_clip.1} parent=0 // pred_check_branch
    %7 = sbr.rel (0) target = $region5
  $region4: #{_scale_clip.1} parent=0 // pred_region
    _
  $region5: #{_scale_clip.1} parent=0 // pred_fallthru
    _
  %v8 = vld [vmem:[%s0] sm:$0xf]
  %v9 = vmul.f32 %v8, 0.5
  %v10 = vmax.f32 %v9, -0.25
  %v11 = vmin.f32 %v10, 0.25
  %v12 = vlaneseq
  %vm13 = vcmp.ge.s32.totalorder %v12, 0
  %vm14 = vcmp.lt.s32.totalorder %v12, 512
  %vm15 = vmand %vm13, %vm14
  %16 = vst.msk [vmem:[%s1] sm:$0xf] %vm15, %v11
  // Predicated region
  $region6: #{_scale_clip.1} parent=0 // pred_check
    _
  $region7: #{_scale_clip.1} parent=0 // pred_check_branch
    %18 = sbr.rel (0) target = $region9
  $region8: #{_scale_clip.1} parent=0 // pred_region
    _
  $region9: #{_scale_clip.1} parent=0 // pred_fallthru
    _
  // Predicated region
  $region10: #{_scale_clip.1} parent=0 // pred_check
    _
  $region11: #{_scale_clip.1} parent=0 // pred_check_branch
    %20 = sbr.rel (0) target = $region13
  $region12: #{_scale_clip.1} parent=0 // pred_region
    _
  $region13: #{_scale_clip.1} parent=0 // pred_fallthru
    _

</llo_original>
